<compile_context>
chip_gen: v7x
topology: tpu7x:2x2x1
jax: 0.10.0
libtpu: 0.0.40
codegen_flags: <defaults>
</compile_context>

<pallas_src>
import functools

import jax
import jax.numpy as jnp
from jax.experimental import pallas as pl
from jax.experimental.pallas import tpu as pltpu

INPUT_DIMS = 32      # L in the hi-ml docstring
HIDDEN_DIMS = 16     # D
ATTENTION_DIMS = 1   # K
NUM_TILES = 8        # N (number of instance/tile encodings)


def gated_attention_kernel(feat_ref,
                           wv_ref, bv_ref,
                           wu_ref, bu_ref,
                           ww_ref, bw_ref,
                           attn_ref, pooled_ref):
    feats = feat_ref[...]                                   # (N, L) f32

    # attention_V: Linear + Tanh      (weights pre-transposed to (L, H))
    a_v = jnp.tanh(
        jnp.dot(feats, wv_ref[...], preferred_element_type=jnp.float32) + bv_ref[...])
    # attention_U: Linear + Sigmoid
    a_u = jax.nn.sigmoid(
        jnp.dot(feats, wu_ref[...], preferred_element_type=jnp.float32) + bu_ref[...])

    gated = a_v * a_u                                       # (N, H)

    # attention_weights Linear, computed directly in the transposed (K, N)
    # layout: ww is kept in torch-native (K, H); contract H against H
    # (trans-B matmul) so no explicit transpose / relayout is needed.
    logits_t = jax.lax.dot_general(
        ww_ref[...], gated, (((1,), (1,)), ((), ())),
        preferred_element_type=jnp.float32) + bw_ref[...]   # (K, N)

    # softmax over the tile axis (lanes)
    logits_t = logits_t - jnp.max(logits_t, axis=-1, keepdims=True)
    p = jnp.exp(logits_t)
    attn = p / jnp.sum(p, axis=-1, keepdims=True)           # (K, N)

    attn_ref[...] = attn
    # pooled_features = attn @ feats
    pooled_ref[...] = jnp.dot(attn, feats, preferred_element_type=jnp.float32)


def gated_attention(features, params):
    """Mirrors GatedAttentionLayer.forward.

    features: any shape reshapable to (-1, input_dims).
    Returns (attention_weights (K, N), pooled_features (K, input_dims)).
    """
    feats = features.reshape(-1, INPUT_DIMS)                # torch .view(-1, L)
    n = feats.shape[0]
    vmem = pl.BlockSpec(memory_space=pltpu.MemorySpace.VMEM)
    args = (feats,
            params["wv"], params["bv"],
            params["wu"], params["bu"],
            params["ww"], params["bw"])
    attn, pooled = pl.pallas_call(
        gated_attention_kernel,
        out_shape=(jax.ShapeDtypeStruct((ATTENTION_DIMS, n), jnp.float32),
                   jax.ShapeDtypeStruct((ATTENTION_DIMS, INPUT_DIMS), jnp.float32)),
        in_specs=[vmem] * len(args),
        out_specs=(vmem, vmem),
    )(*args)
    return attn, pooled


def gated_attention_reference(features, params):
    """Pure-jnp reference (same math as the PyTorch module, eval mode)."""
    feats = features.reshape(-1, INPUT_DIMS)
    a_v = jnp.tanh(feats @ params["wv"] + params["bv"])
    a_u = jax.nn.sigmoid(feats @ params["wu"] + params["bu"])
    logits = (a_v * a_u) @ params["ww"].T + params["bw"].reshape(1, -1)  # (N, K)
    attn = jax.nn.softmax(logits.T, axis=1)                              # (K, N)
    pooled = attn @ feats
    return attn, pooled


def init_params(key):
    """Deterministic synthetic parameters (Linear weights pre-transposed where noted)."""
    ks = jax.random.split(key, 6)
    w = lambda k, shape: (0.1 * jax.random.normal(k, shape)).astype(jnp.float32)
    return {
        # attention_V / attention_U Linear(L -> H): stored as (L, H) for x @ W form.
        "wv": w(ks[0], (INPUT_DIMS, HIDDEN_DIMS)),
        "bv": w(ks[1], (1, HIDDEN_DIMS)),
        "wu": w(ks[2], (INPUT_DIMS, HIDDEN_DIMS)),
        "bu": w(ks[3], (1, HIDDEN_DIMS)),
        # attention_weights Linear(H -> K): torch-native (K, H) for the trans-B matmul.
        "ww": w(ks[4], (ATTENTION_DIMS, HIDDEN_DIMS)),
        # bias stored as (K, 1) so it broadcasts across the N (lane) axis in-kernel.
        "bw": w(ks[5], (ATTENTION_DIMS, 1)),
    }


if __name__ == "__main__":
    key = jax.random.PRNGKey(0)
    k_feat, k_param = jax.random.split(key)

    features = jax.random.normal(k_feat, (NUM_TILES, INPUT_DIMS), dtype=jnp.float32)
    params = init_params(k_param)

    attn_w, pooled = gated_attention(features, params)
    jax.block_until_ready((attn_w, pooled))

    assert attn_w.shape == (ATTENTION_DIMS, NUM_TILES)
    assert pooled.shape == (ATTENTION_DIMS, INPUT_DIMS)

    # correctness check against a pure-JAX reference of the module math
    ref_attn, ref_pooled = gated_attention_reference(features, params)
    assert jnp.allclose(attn_w, ref_attn, rtol=1e-5, atol=1e-5)
    assert jnp.allclose(pooled, ref_pooled, rtol=1e-5, atol=1e-5)
    assert jnp.allclose(jnp.sum(attn_w, axis=-1), 1.0, atol=1e-5)

    print("KERNEL_OK")
</pallas_src>

<mosaic_0001>
module attributes {stable_mosaic.version = 11 : i64} {
  func.func @gated_attention_kernel(%arg0: memref<8x32xf32, #tpu.memory_space<vmem>>, %arg1: memref<32x16xf32, #tpu.memory_space<vmem>>, %arg2: memref<1x16xf32, #tpu.memory_space<vmem>>, %arg3: memref<32x16xf32, #tpu.memory_space<vmem>>, %arg4: memref<1x16xf32, #tpu.memory_space<vmem>>, %arg5: memref<1x16xf32, #tpu.memory_space<vmem>>, %arg6: memref<1x1xf32, #tpu.memory_space<vmem>>, %arg7: memref<1x8xf32, #tpu.memory_space<vmem>>, %arg8: memref<1x32xf32, #tpu.memory_space<vmem>>) attributes {dimension_semantics = [], scalar_prefetch = 0 : i64, scratch_operands = 0 : i64, tpu.core_type = #tpu.core_type<tc>} {
    %c0 = arith.constant 0 : index
    %c0_0 = arith.constant 0 : index
    %0 = vector.load %arg0[%c0, %c0_0] : memref<8x32xf32, #tpu.memory_space<vmem>>, vector<8x32xf32>
    %c0_1 = arith.constant 0 : index
    %c0_2 = arith.constant 0 : index
    %1 = vector.load %arg1[%c0_1, %c0_2] : memref<32x16xf32, #tpu.memory_space<vmem>>, vector<32x16xf32>
    %cst = arith.constant dense<0.000000e+00> : vector<8x16xf32>
    %2 = tpu.matmul %0, %1, %cst {dimension_numbers = #tpu.dot_dimension_numbers<[1], [0], [0], [1], [0, 0, 1, 1], [], []>} : vector<8x32xf32>, vector<32x16xf32>, vector<8x16xf32> -> vector<8x16xf32>
    %c0_3 = arith.constant 0 : index
    %c0_4 = arith.constant 0 : index
    %3 = vector.load %arg2[%c0_3, %c0_4] : memref<1x16xf32, #tpu.memory_space<vmem>>, vector<1x16xf32>
    %4 = vector.broadcast %3 : vector<1x16xf32> to vector<8x16xf32>
    %5 = arith.addf %2, %4 : vector<8x16xf32>
    %6 = math.tanh %5 : vector<8x16xf32>
    %c0_5 = arith.constant 0 : index
    %c0_6 = arith.constant 0 : index
    %7 = vector.load %arg3[%c0_5, %c0_6] : memref<32x16xf32, #tpu.memory_space<vmem>>, vector<32x16xf32>
    %cst_7 = arith.constant dense<0.000000e+00> : vector<8x16xf32>
    %8 = tpu.matmul %0, %7, %cst_7 {dimension_numbers = #tpu.dot_dimension_numbers<[1], [0], [0], [1], [0, 0, 1, 1], [], []>} : vector<8x32xf32>, vector<32x16xf32>, vector<8x16xf32> -> vector<8x16xf32>
    %c0_8 = arith.constant 0 : index
    %c0_9 = arith.constant 0 : index
    %9 = vector.load %arg4[%c0_8, %c0_9] : memref<1x16xf32, #tpu.memory_space<vmem>>, vector<1x16xf32>
    %10 = vector.broadcast %9 : vector<1x16xf32> to vector<8x16xf32>
    %11 = arith.addf %8, %10 : vector<8x16xf32>
    %12 = arith.negf %11 : vector<8x16xf32>
    %13 = math.exp %12 : vector<8x16xf32>
    %cst_10 = arith.constant 1.000000e+00 : f32
    %14 = vector.broadcast %cst_10 : f32 to vector<8x16xf32>
    %15 = arith.addf %14, %13 : vector<8x16xf32>
    %16 = arith.divf %14, %15 : vector<8x16xf32>
    %17 = arith.mulf %6, %16 : vector<8x16xf32>
    %c0_11 = arith.constant 0 : index
    %c0_12 = arith.constant 0 : index
    %18 = vector.load %arg5[%c0_11, %c0_12] : memref<1x16xf32, #tpu.memory_space<vmem>>, vector<1x16xf32>
    %cst_13 = arith.constant dense<0.000000e+00> : vector<1x8xf32>
    %19 = tpu.matmul %18, %17, %cst_13 {dimension_numbers = #tpu.dot_dimension_numbers<[1], [1], [0], [0], [0, 0, 1, 0], [], []>} : vector<1x16xf32>, vector<8x16xf32>, vector<1x8xf32> -> vector<1x8xf32>
    %c0_14 = arith.constant 0 : index
    %c0_15 = arith.constant 0 : index
    %20 = vector.load %arg6[%c0_14, %c0_15] : memref<1x1xf32, #tpu.memory_space<vmem>>, vector<1x1xf32>
    %21 = vector.broadcast %20 : vector<1x1xf32> to vector<1x8xf32>
    %22 = arith.addf %19, %21 : vector<1x8xf32>
    %cst_16 = arith.constant dense<0xFF800000> : vector<1xf32>
    %23 = vector.multi_reduction <maximumf>, %22, %cst_16 [1] : vector<1x8xf32> to vector<1xf32>
    %24 = vector.shape_cast %23 : vector<1xf32> to vector<1x1xf32>
    %25 = vector.broadcast %24 : vector<1x1xf32> to vector<1x8xf32>
    %26 = arith.subf %22, %25 : vector<1x8xf32>
    %27 = math.exp %26 : vector<1x8xf32>
    %cst_17 = arith.constant dense<0.000000e+00> : vector<1xf32>
    %28 = vector.multi_reduction <add>, %27, %cst_17 [1] : vector<1x8xf32> to vector<1xf32>
    %29 = vector.shape_cast %28 : vector<1xf32> to vector<1x1xf32>
    %30 = vector.broadcast %29 : vector<1x1xf32> to vector<1x8xf32>
    %31 = arith.divf %27, %30 : vector<1x8xf32>
    %c0_18 = arith.constant 0 : index
    %c0_19 = arith.constant 0 : index
    %32 = vector.load %arg7[%c0_18, %c0_19] : memref<1x8xf32, #tpu.memory_space<vmem>>, vector<1x8xf32>
    tpu.vector_store %arg7[%c0_18, %c0_19], %31 {strides = array<i32>} : memref<1x8xf32, #tpu.memory_space<vmem>>, vector<1x8xf32>,
    %cst_20 = arith.constant dense<0.000000e+00> : vector<1x32xf32>
    %33 = tpu.matmul %31, %0, %cst_20 {dimension_numbers = #tpu.dot_dimension_numbers<[1], [0], [0], [1], [0, 0, 1, 1], [], []>} : vector<1x8xf32>, vector<8x32xf32>, vector<1x32xf32> -> vector<1x32xf32>
    %c0_21 = arith.constant 0 : index
    %c0_22 = arith.constant 0 : index
    %34 = vector.load %arg8[%c0_21, %c0_22] : memref<1x32xf32, #tpu.memory_space<vmem>>, vector<1x32xf32>
    tpu.vector_store %arg8[%c0_21, %c0_22], %33 {strides = array<i32>} : memref<1x32xf32, #tpu.memory_space<vmem>>, vector<1x32xf32>,
    return
  }
}

</mosaic_0001>

<llo_original>
// kernel: tpu_custom_call.1
$region0: #{tpu_custom_call.1}
  #allocation0 [shape = 'u32[]', space=smem, size = 0x4, offset = 0x4, fixed_abs, tag = 'smem constant byte address 0x4 - core index']
  #allocation1 [shape = 'u32[144,128]{1,0:T(1,128)}', space=vmem, size = 0x12000, scoped, tag = 'internal scratch']
  #allocation2 [shape = 'f32[1,1]{1,0:T(1,128)S(1)}', space=vmem, size = 0x200, scoped, tag = 'scoped memory for tpu_custom_call.1']
  %s0 = inlined_call_operand.vmem [shape: f32[8,32], index: 0, kind: input, shape index: {}]
  %s1 = inlined_call_operand.vmem [shape: f32[32,16], index: 1, kind: input, shape index: {}]
  %s2 = inlined_call_operand.vmem [shape: f32[1,16], index: 2, kind: input, shape index: {}]
  %s3 = inlined_call_operand.vmem [shape: f32[32,16], index: 3, kind: input, shape index: {}]
  %s4 = inlined_call_operand.vmem [shape: f32[1,16], index: 4, kind: input, shape index: {}]
  %s5 = inlined_call_operand.vmem [shape: f32[1,16], index: 5, kind: input, shape index: {}]
  %s6 = inlined_call_operand.<no memory space> [shape: f32[1,1], index: 6, kind: input, shape index: {}]
  %s7 = inlined_call_operand.hbm [shape: f32[1,8], index: 7, kind: output, shape index: {0}]
  %s8 = inlined_call_operand.hbm [shape: f32[1,32], index: 8, kind: output, shape index: {1}]
  %9 = xla_tuple %s7, %s8
  %s10 = sld [smem:[#allocation0]]
  $region46: #{tpu_custom_call.1} parent=0
    _
  %s12 = ssub.s32 1, %s10
  %s13 = scalar_select 0, %s12, %s10
  %v14 = vstv %s6
  %15 = vst [vmem:[#allocation2] sm:$0x1] %v14
  $region1: #{tpu_custom_call.1} parent=0
    #allocation3 [shape = 'u8[512]{0}', space=vmem, size = 0x400, scoped, tag = 'output window, operand 0, single buffered']
    #allocation4 [shape = 's32[1]{0}', space=sflag, size = 0x4, scoped, tag = 'scoped memory for tpu_custom_call.1']
    #allocation5 [shape = 'u8[512]{0}', space=vmem, size = 0x400, scoped, tag = 'output window, operand 1, single buffered']
    #allocation6 [shape = 's32[1]{0}', space=sflag, size = 0x4, scoped, tag = 'scoped memory for tpu_custom_call.1']
    %16 = vsyncpa [#allocation4], 0
    %17 = vsyncpa [#allocation6], 0
    // Predicated region
    $region2: #{tpu_custom_call.1} parent=1 // pred_check
      _
    $region3: #{tpu_custom_call.1} parent=1 // pred_check_branch
      %19 = sbr.rel (0) target = $region5
    $region4: #{tpu_custom_call.1} parent=1 // pred_region
      _
    $region5: #{tpu_custom_call.1} parent=1 // pred_fallthru
      _
    // Predicated region
    $region6: #{tpu_custom_call.1} parent=1 // pred_check
      _
    $region7: #{tpu_custom_call.1} parent=1 // pred_check_branch
      %21 = sbr.rel (0) target = $region9
    $region8: #{tpu_custom_call.1} parent=1 // pred_region
      _
    $region9: #{tpu_custom_call.1} parent=1 // pred_fallthru
      _
    // Predicated region
    $region10: #{tpu_custom_call.1} parent=1 // pred_check
      _
    $region11: #{tpu_custom_call.1} parent=1 // pred_check_branch
      %23 = sbr.rel (0) target = $region13
    $region12: #{tpu_custom_call.1} parent=1 // pred_region
      _
    $region13: #{tpu_custom_call.1} parent=1 // pred_fallthru
      _
    // Predicated region
    $region14: #{tpu_custom_call.1} parent=1 // pred_check
      _
    $region15: #{tpu_custom_call.1} parent=1 // pred_check_branch
      %25 = sbr.rel (0) target = $region17
    $region16: #{tpu_custom_call.1} parent=1 // pred_region
      _
    $region17: #{tpu_custom_call.1} parent=1 // pred_fallthru
      _
    // Predicated region
    $region18: #{tpu_custom_call.1} parent=1 // pred_check
      _
    $region19: #{tpu_custom_call.1} parent=1 // pred_check_branch
      %27 = sbr.rel (0) target = $region21
    $region20: #{tpu_custom_call.1} parent=1 // pred_region
      _
    $region21: #{tpu_custom_call.1} parent=1 // pred_fallthru
      _
    // Predicated region
    $region22: #{tpu_custom_call.1} parent=1 // pred_check
      _
    $region23: #{tpu_custom_call.1} parent=1 // pred_check_branch
      %29 = sbr.rel (0) target = $region25
    $region24: #{tpu_custom_call.1} parent=1 // pred_region
      _
    $region25: #{tpu_custom_call.1} parent=1 // pred_fallthru
      _
    // Predicated region
    $region26: #{tpu_custom_call.1} parent=1 // pred_check
      _
    $region27: #{tpu_custom_call.1} parent=1 // pred_check_branch
      %31 = sbr.rel (0) target = $region29
    $region28: #{tpu_custom_call.1} parent=1 // pred_region
      _
    $region29: #{tpu_custom_call.1} parent=1 // pred_fallthru
      _
    %v32 = vld [vmem:[%s0] sm:$0xff]
    %v33 = vld [vmem:[%s1] sm:$0xff]
    %v34 = vld [vmem:[%s1 + $0x8] sm:$0xff]
    %v35 = vld [vmem:[%s1 + $0x10] sm:$0xff]
    %v36 = vld [vmem:[%s1 + $0x18] sm:$0xff]
    %v37 = vld [vmem:[%s2] sm:$0x1]
    %v39 = vlaneseq
    %v40 = vshrl.u32 %v39, 7
    %v41 = vsub.s32 0, %v40
    %v42 = vrot.slane %v37, %v41
    %vm44 = vcmask 261120
    %v46 = vsel %vm44, %v32, 0
    %48 = vmatprep.subr.mxu0 0.0
    %49 = vmatpush1.msra.mxu0 %v33
    %50 = vmatprep.subr.mxu0 0.0
    %51 = vmatpush1.msra.mxu0 %v34
    %52 = vmatprep.subr.mxu0 0.0
    %53 = vmatpush1.msra.mxu0 %v35
    %54 = vmatprep.subr.mxu0 0.0
    %55 = vmatpush1.msra.mxu0 %v36
    %56 = vmatprep.subr.mxu0 0.0
    %57 = vmatpush1.msra.mxu0 0.0
    %58 = vmatprep.subr.mxu0 0.0
    %59 = vmatpush1.msra.mxu0 0.0
    %60 = vmatprep.subr.mxu0 0.0
    %61 = vmatpush1.msra.mxu0 0.0
    %62 = vmatprep.subr.mxu0 0.0
    %63 = vmatpush1.msra.mxu0 0.0
    %64 = vmatprep.subr.mxu0 0.0
    %65 = vmatpush1.msra.mxu0 0.0
    %66 = vmatprep.subr.mxu0 0.0
    %67 = vmatpush1.msra.mxu0 0.0
    %68 = vmatprep.subr.mxu0 0.0
    %69 = vmatpush1.msra.mxu0 0.0
    %70 = vmatprep.subr.mxu0 0.0
    %71 = vmatpush1.msra.mxu0 0.0
    %72 = vmatprep.subr.mxu0 0.0
    %73 = vmatpush1.msra.mxu0 0.0
    %74 = vmatprep.subr.mxu0 0.0
    %75 = vmatpush1.msra.mxu0 0.0
    %76 = vmatprep.subr.mxu0 0.0
    %77 = vmatpush1.msra.mxu0 0.0
    %78 = vmatprep.subr.mxu0 0.0
    %79 = vmatpush1.msra.mxu0 0.0
    %80 = vmatprep.subr.mxu0 0.0
    %81 = vmatpush1.msra.mxu0 0.0
    %82 = vmatprep.subr.mxu0 0.0
    %83 = vmatpush1.msra.mxu0 0.0
    %84 = vmatprep.subr.mxu0 0.0
    %85 = vmatpush1.msra.mxu0 0.0
    %86 = vmatprep.subr.mxu0 0.0
    %87 = vmatpush1.msra.mxu0 0.0
    %88 = vmatprep.subr.mxu0 0.0
    %89 = vmatpush1.msra.mxu0 0.0
    %90 = vmatprep.subr.mxu0 0.0
    %91 = vmatpush1.msra.mxu0 0.0
    %92 = vmatprep.subr.mxu0 0.0
    %93 = vmatpush1.msra.mxu0 0.0
    %94 = vmatprep.subr.mxu0 0.0
    %95 = vmatpush1.msra.mxu0 0.0
    %96 = vmatprep.subr.mxu0 0.0
    %97 = vmatpush1.msra.mxu0 0.0
    %98 = vmatprep.subr.mxu0 0.0
    %99 = vmatpush1.msra.mxu0 0.0
    %100 = vmatprep.subr.mxu0 0.0
    %101 = vmatpush1.msra.mxu0 0.0
    %102 = vmatprep.subr.mxu0 0.0
    %103 = vmatpush1.msra.mxu0 0.0
    %104 = vmatprep.subr.mxu0 0.0
    %105 = vmatpush1.msra.mxu0 0.0
    %106 = vmatprep.subr.mxu0 0.0
    %107 = vmatpush1.msra.mxu0 0.0
    %108 = vmatprep.subr.mxu0 0.0
    %109 = vmatpush1.msra.mxu0 0.0
    %110 = vmatprep.subr.mxu0 0.0
    %111 = vmatpush1.msra.mxu0 0.0
    %112 = vmatprep.mubr.f32.mxu0 0.0
    %113 = vmatmul.mubr.f32.gmra.mrb[0].mxu0 %v46
    %v114 = vpop.f32.mrb[0].mxu0
    %v115 = vadd.f32 %v42, %v114
    %v116 = vpop.f32.mrb[0].mxu0
    %117 = vdwg.mxu0
    %v118 = vtanh.pop %v115
    %v119 = vld [vmem:[%s3] sm:$0xff]
    %v120 = vld [vmem:[%s3 + $0x8] sm:$0xff]
    %v121 = vld [vmem:[%s3 + $0x10] sm:$0xff]
    %v122 = vld [vmem:[%s3 + $0x18] sm:$0xff]
    %v123 = vld [vmem:[%s4] sm:$0x1]
    %v125 = vlaneseq
    %v126 = vshrl.u32 %v125, 7
    %v127 = vsub.s32 0, %v126
    %v128 = vrot.slane %v123, %v127
    %130 = vmatprep.subr.mxu0 0.0
    %131 = vmatpush1.msra.mxu0 %v119
    %132 = vmatprep.subr.mxu0 0.0
    %133 = vmatpush1.msra.mxu0 %v120
    %134 = vmatprep.subr.mxu0 0.0
    %135 = vmatpush1.msra.mxu0 %v121
    %136 = vmatprep.subr.mxu0 0.0
    %137 = vmatpush1.msra.mxu0 %v122
    %138 = vmatprep.subr.mxu0 0.0
    %139 = vmatpush1.msra.mxu0 0.0
    %140 = vmatprep.subr.mxu0 0.0
    %141 = vmatpush1.msra.mxu0 0.0
    %142 = vmatprep.subr.mxu0 0.0
    %143 = vmatpush1.msra.mxu0 0.0
    %144 = vmatprep.subr.mxu0 0.0
    %145 = vmatpush1.msra.mxu0 0.0
    %146 = vmatprep.subr.mxu0 0.0
    %147 = vmatpush1.msra.mxu0 0.0
    %148 = vmatprep.subr.mxu0 0.0
    %149 = vmatpush1.msra.mxu0 0.0
    %150 = vmatprep.subr.mxu0 0.0
    %151 = vmatpush1.msra.mxu0 0.0
    %152 = vmatprep.subr.mxu0 0.0
    %153 = vmatpush1.msra.mxu0 0.0
    %154 = vmatprep.subr.mxu0 0.0
    %155 = vmatpush1.msra.mxu0 0.0
    %156 = vmatprep.subr.mxu0 0.0
    %157 = vmatpush1.msra.mxu0 0.0
    %158 = vmatprep.subr.mxu0 0.0
    %159 = vmatpush1.msra.mxu0 0.0
    %160 = vmatprep.subr.mxu0 0.0
    %161 = vmatpush1.msra.mxu0 0.0
    %162 = vmatprep.subr.mxu0 0.0
    %163 = vmatpush1.msra.mxu0 0.0
    %164 = vmatprep.subr.mxu0 0.0
    %165 = vmatpush1.msra.mxu0 0.0
    %166 = vmatprep.subr.mxu0 0.0
    %167 = vmatpush1.msra.mxu0 0.0
    %168 = vmatprep.subr.mxu0 0.0
    %169 = vmatpush1.msra.mxu0 0.0
    %170 = vmatprep.subr.mxu0 0.0
    %171 = vmatpush1.msra.mxu0 0.0
    %172 = vmatprep.subr.mxu0 0.0
    %173 = vmatpush1.msra.mxu0 0.0
    %174 = vmatprep.subr.mxu0 0.0
    %175 = vmatpush1.msra.mxu0 0.0
    %176 = vmatprep.subr.mxu0 0.0
    %177 = vmatpush1.msra.mxu0 0.0
    %178 = vmatprep.subr.mxu0 0.0
    %179 = vmatpush1.msra.mxu0 0.0
    %180 = vmatprep.subr.mxu0 0.0
    %181 = vmatpush1.msra.mxu0 0.0
    %182 = vmatprep.subr.mxu0 0.0
    %183 = vmatpush1.msra.mxu0 0.0
    %184 = vmatprep.subr.mxu0 0.0
    %185 = vmatpush1.msra.mxu0 0.0
    %186 = vmatprep.subr.mxu0 0.0
    %187 = vmatpush1.msra.mxu0 0.0
    %188 = vmatprep.subr.mxu0 0.0
    %189 = vmatpush1.msra.mxu0 0.0
    %190 = vmatprep.subr.mxu0 0.0
    %191 = vmatpush1.msra.mxu0 0.0
    %192 = vmatprep.subr.mxu0 0.0
    %193 = vmatpush1.msra.mxu0 0.0
    %194 = vmatprep.mubr.f32.mxu0 0.0
    %195 = vmatmul.mubr.f32.gmra.mrb[0].mxu0 %v46
    %v196 = vpop.f32.mrb[0].mxu0
    %v197 = vadd.f32 %v128, %v196
    %v198 = vpop.f32.mrb[0].mxu0
    %199 = vdwg.mxu0
    %v200 = vxor.u32 %v197, 2147483648
    %v201 = vmul.f32 %v200, 1.442695
    %v202 = vpow.pop %v201
    %v203 = vadd.f32 %v202, 1.0
    %v204 = vrcp.pop %v203
    %v205 = vmul.f32 1.0, %v204
    %v206 = vmul.f32 %v118, %v205
    %v207 = vld [vmem:[%s5] sm:$0x1]
    %v208 = vld [vmem:[#allocation2] sm:$0x1]
    %210 = vset.pattern.permute.xlu0 0
    %211 = vperm.xlu0 %210, %v208
    %v212 = vpop.permute.xlu0 %211
    %v214 = vlaneseq
    %v215 = vshrl.u32 %v214, 7
    %v216 = vsub.s32 0, %v215
    %v217 = vrot.slane %v212, %v216
    %vm218 = vcmask 130048
    %v220 = vsel %vm218, %v207, 0
    %v223 = vsel %vm218, %v206, 0
    %225 = vmatprep.subr.mxu0 0.0
    %226 = vmatpush1.xpose.msra.mxu0 %v223
    %227 = vmatprep.subr.mxu0 0.0
    %228 = vmatpush1.xpose.msra.mxu0 0.0
    %229 = vmatprep.subr.mxu0 0.0
    %230 = vmatpush1.xpose.msra.mxu0 0.0
    %231 = vmatprep.subr.mxu0 0.0
    %232 = vmatpush1.xpose.msra.mxu0 0.0
    %233 = vmatprep.subr.mxu0 0.0
    %234 = vmatpush1.xpose.msra.mxu0 0.0
    %235 = vmatprep.subr.mxu0 0.0
    %236 = vmatpush1.xpose.msra.mxu0 0.0
    %237 = vmatprep.subr.mxu0 0.0
    %238 = vmatpush1.xpose.msra.mxu0 0.0
    %239 = vmatprep.subr.mxu0 0.0
    %240 = vmatpush1.xpose.msra.mxu0 0.0
    %241 = vmatprep.subr.mxu0 0.0
    %242 = vmatpush1.xpose.msra.mxu0 0.0
    %243 = vmatprep.subr.mxu0 0.0
    %244 = vmatpush1.xpose.msra.mxu0 0.0
    %245 = vmatprep.subr.mxu0 0.0
    %246 = vmatpush1.xpose.msra.mxu0 0.0
    %247 = vmatprep.subr.mxu0 0.0
    %248 = vmatpush1.xpose.msra.mxu0 0.0
    %249 = vmatprep.subr.mxu0 0.0
    %250 = vmatpush1.xpose.msra.mxu0 0.0
    %251 = vmatprep.subr.mxu0 0.0
    %252 = vmatpush1.xpose.msra.mxu0 0.0
    %253 = vmatprep.subr.mxu0 0.0
    %254 = vmatpush1.xpose.msra.mxu0 0.0
    %255 = vmatprep.subr.mxu0 0.0
    %256 = vmatpush1.xpose.msra.mxu0 0.0
    %257 = vmatprep.subr.mxu0 0.0
    %258 = vmatpush1.xpose.msra.mxu0 0.0
    %259 = vmatprep.subr.mxu0 0.0
    %260 = vmatpush1.xpose.msra.mxu0 0.0
    %261 = vmatprep.subr.mxu0 0.0
    %262 = vmatpush1.xpose.msra.mxu0 0.0
    %263 = vmatprep.subr.mxu0 0.0
    %264 = vmatpush1.xpose.msra.mxu0 0.0
    %265 = vmatprep.subr.mxu0 0.0
    %266 = vmatpush1.xpose.msra.mxu0 0.0
    %267 = vmatprep.subr.mxu0 0.0
    %268 = vmatpush1.xpose.msra.mxu0 0.0
    %269 = vmatprep.subr.mxu0 0.0
    %270 = vmatpush1.xpose.msra.mxu0 0.0
    %271 = vmatprep.subr.mxu0 0.0
    %272 = vmatpush1.xpose.msra.mxu0 0.0
    %273 = vmatprep.subr.mxu0 0.0
    %274 = vmatpush1.xpose.msra.mxu0 0.0
    %275 = vmatprep.subr.mxu0 0.0
    %276 = vmatpush1.xpose.msra.mxu0 0.0
    %277 = vmatprep.subr.mxu0 0.0
    %278 = vmatpush1.xpose.msra.mxu0 0.0
    %279 = vmatprep.subr.mxu0 0.0
    %280 = vmatpush1.xpose.msra.mxu0 0.0
    %281 = vmatprep.subr.mxu0 0.0
    %282 = vmatpush1.xpose.msra.mxu0 0.0
    %283 = vmatprep.subr.mxu0 0.0
    %284 = vmatpush1.xpose.msra.mxu0 0.0
    %285 = vmatprep.subr.mxu0 0.0
    %286 = vmatpush1.xpose.msra.mxu0 0.0
    %287 = vmatprep.subr.mxu0 0.0
    %288 = vmatpush1.xpose.msra.mxu0 0.0
    %289 = vmatprep.mubr.f32.mxu0 0.0
    %290 = vmatmul.mubr.f32.gmra.mrb[0].mxu0 %v220
    %v291 = vpop.f32.mrb[0].mxu0
    %v292 = vadd.f32 %v217, %v291
    %v293 = vpop.f32.mrb[0].mxu0
    %294 = vdwg.mxu0
    %vm295 = vcmask 57344
    %v296 = vsel %vm295, %v292, -inf
    %297 = vmax.xlane.f32.xlu0 %v296
    %v298 = vpop.xlane.xlu0 %297
    %v299 = vsub.f32 %v292, %v298
    %v300 = vmul.f32 %v299, 1.442695
    %v301 = vpow.pop %v300
    %v302 = vsel %vm295, %v301, 0.0
    %303 = vadd.xlane.f32.xlu0 %v302
    %v304 = vpop.xlane.xlu0 %303
    %v305 = vrcp.pop %v304
    %v306 = vmul.f32 %v301, %v305
    %307 = vst.msk [vmem:[#allocation3] sm:$0x1] %vm295, %v306
    %vm308 = vcmask 64512
    %v310 = vsel %vm308, %v306, 0
    %312 = vmatprep.subr.mxu0 0.0
    %313 = vmatpush1.msra.mxu0 %v32
    %314 = vmatprep.subr.mxu0 0.0
    %315 = vmatpush1.msra.mxu0 0.0
    %316 = vmatprep.subr.mxu0 0.0
    %317 = vmatpush1.msra.mxu0 0.0
    %318 = vmatprep.subr.mxu0 0.0
    %319 = vmatpush1.msra.mxu0 0.0
    %320 = vmatprep.subr.mxu0 0.0
    %321 = vmatpush1.msra.mxu0 0.0
    %322 = vmatprep.subr.mxu0 0.0
    %323 = vmatpush1.msra.mxu0 0.0
    %324 = vmatprep.subr.mxu0 0.0
    %325 = vmatpush1.msra.mxu0 0.0
    %326 = vmatprep.subr.mxu0 0.0
    %327 = vmatpush1.msra.mxu0 0.0
    %328 = vmatprep.subr.mxu0 0.0
    %329 = vmatpush1.msra.mxu0 0.0
    %330 = vmatprep.subr.mxu0 0.0
    %331 = vmatpush1.msra.mxu0 0.0
    %332 = vmatprep.subr.mxu0 0.0
    %333 = vmatpush1.msra.mxu0 0.0
    %334 = vmatprep.subr.mxu0 0.0
    %335 = vmatpush1.msra.mxu0 0.0
    %336 = vmatprep.subr.mxu0 0.0
    %337 = vmatpush1.msra.mxu0 0.0
    %338 = vmatprep.subr.mxu0 0.0
    %339 = vmatpush1.msra.mxu0 0.0
    %340 = vmatprep.subr.mxu0 0.0
    %341 = vmatpush1.msra.mxu0 0.0
    %342 = vmatprep.subr.mxu0 0.0
    %343 = vmatpush1.msra.mxu0 0.0
    %344 = vmatprep.subr.mxu0 0.0
    %345 = vmatpush1.msra.mxu0 0.0
    %346 = vmatprep.subr.mxu0 0.0
    %347 = vmatpush1.msra.mxu0 0.0
    %348 = vmatprep.subr.mxu0 0.0
    %349 = vmatpush1.msra.mxu0 0.0
    %350 = vmatprep.subr.mxu0 0.0
    %351 = vmatpush1.msra.mxu0 0.0
    %352 = vmatprep.subr.mxu0 0.0
    %353 = vmatpush1.msra.mxu0 0.0
    %354 = vmatprep.subr.mxu0 0.0
    %355 = vmatpush1.msra.mxu0 0.0
    %356 = vmatprep.subr.mxu0 0.0
    %357 = vmatpush1.msra.mxu0 0.0
    %358 = vmatprep.subr.mxu0 0.0
    %359 = vmatpush1.msra.mxu0 0.0
    %360 = vmatprep.subr.mxu0 0.0
    %361 = vmatpush1.msra.mxu0 0.0
    %362 = vmatprep.subr.mxu0 0.0
    %363 = vmatpush1.msra.mxu0 0.0
    %364 = vmatprep.subr.mxu0 0.0
    %365 = vmatpush1.msra.mxu0 0.0
    %366 = vmatprep.subr.mxu0 0.0
    %367 = vmatpush1.msra.mxu0 0.0
    %368 = vmatprep.subr.mxu0 0.0
    %369 = vmatpush1.msra.mxu0 0.0
    %370 = vmatprep.subr.mxu0 0.0
    %371 = vmatpush1.msra.mxu0 0.0
    %372 = vmatprep.subr.mxu0 0.0
    %373 = vmatpush1.msra.mxu0 0.0
    %374 = vmatprep.subr.mxu0 0.0
    %375 = vmatpush1.msra.mxu0 0.0
    %376 = vmatprep.mubr.f32.mxu0 0.0
    %377 = vmatmul.mubr.f32.gmra.mrb[0].mxu0 %v310
    %v378 = vpop.f32.mrb[0].mxu0
    %v379 = vadd.f32 0.0, %v378
    %v380 = vpop.f32.mrb[0].mxu0
    %381 = vdwg.mxu0
    %vm382 = vcmask 253952
    %383 = vst.msk [vmem:[#allocation5] sm:$0x1] %vm382, %v379
    // Predicated region
    $region30: #{tpu_custom_call.1} parent=1 // pred_check
      _
    $region31: #{tpu_custom_call.1} parent=1 // pred_check_branch
      %385 = sbr.rel (0) target = $region33
    $region32: #{tpu_custom_call.1} parent=1 // pred_region
      %s387 = ssub.s32 16, 16
      %388 = vsyncadd [#allocation4], %s387
      %s390 = sshll.u32 [#allocation3], 4
      %s391 = int_to_ptr.vmem [resolvable:$true] %s390
      %393 = dma.vmem_to_hbm [thread:$0]  %s391, 16, %s7, [#allocation4]
    $region33: #{tpu_custom_call.1} parent=1 // pred_fallthru
      _
    // Predicated region
    $region34: #{tpu_custom_call.1} parent=1 // pred_check
      _
    $region35: #{tpu_custom_call.1} parent=1 // pred_check_branch
      %395 = sbr.rel (0) target = $region37
    $region36: #{tpu_custom_call.1} parent=1 // pred_region
      %s397 = ssub.s32 16, 16
      %398 = vsyncadd [#allocation6], %s397
      %s400 = sshll.u32 [#allocation5], 4
      %s401 = int_to_ptr.vmem [resolvable:$true] %s400
      %403 = dma.vmem_to_hbm [thread:$0]  %s401, 16, %s8, [#allocation6]
    $region37: #{tpu_custom_call.1} parent=1 // pred_fallthru
      _
    // Predicated region
    $region38: #{tpu_custom_call.1} parent=1 // pred_check
      _
    $region39: #{tpu_custom_call.1} parent=1 // pred_check_branch
      %405 = sbr.rel (0) target = $region41
    $region40: #{tpu_custom_call.1} parent=1 // pred_region
      %406 = dma.done [#allocation4], 16
    $region41: #{tpu_custom_call.1} parent=1 // pred_fallthru
      _
    // Predicated region
    $region42: #{tpu_custom_call.1} parent=1 // pred_check
      _
    $region43: #{tpu_custom_call.1} parent=1 // pred_check_branch
      %408 = sbr.rel (0) target = $region45
    $region44: #{tpu_custom_call.1} parent=1 // pred_region
      %409 = dma.done [#allocation6], 16
    $region45: #{tpu_custom_call.1} parent=1 // pred_fallthru
      _
    %410 = vsyncpa [#allocation4], 1
    %411 = vsyncpa [#allocation6], 1

</llo_original>
